<compile_context>
chip_gen: v5e
topology: v5e:2x2
jax: 0.10.0
libtpu: 0.0.40
codegen_flags: <defaults>
</compile_context>

<pallas_src>
import functools

import jax
import jax.numpy as jnp
from jax.experimental import pallas as pl
from jax.experimental.pallas import tpu as pltpu

INPUT_SIZE = 784
HIDDEN = 50
NUM_CLASSES = 10

# Lane-padded sizes (multiples of 128) for lane-dense matmuls / stores.
HIDDEN_P = 128
OUT_P = 128


def _round_up(n, m):
    return ((n + m - 1) // m) * m


def mlp_kernel(x_ref, w1_ref, b_ref, w2_ref, o_ref):
    # x_ref:  (bb, 784)  f32        w1_ref: (784, 128) bf16
    # b_ref:  (2, 128)   f32  (row 0 = b1 padded, row 1 = b2 padded)
    # w2_ref: (128, 128) bf16       o_ref:  (bb, 128)  bf16
    x = x_ref[...].astype(jnp.bfloat16)            # cast in-kernel (no extra HBM pass)
    h = jnp.dot(x, w1_ref[...], preferred_element_type=jnp.float32) + b_ref[0:1, :]
    h = jnp.maximum(h, 0.0).astype(jnp.bfloat16)   # F.relu
    y = jnp.dot(h, w2_ref[...], preferred_element_type=jnp.float32) + b_ref[1:2, :]
    o_ref[...] = y.astype(o_ref.dtype)             # lane-dense bf16 store


def prepare_params(w1, b1, w2, b2):
    """One-time pad/cast of the weights (hoisted out of the per-call path).

    Zero-padding the hidden/output dims is exact: padded hidden units compute
    relu(0 + 0) = 0 and padded w2 rows/cols are zero, so real outputs match.
    """
    w1_p = jnp.zeros((INPUT_SIZE, HIDDEN_P), jnp.bfloat16).at[:, :HIDDEN].set(
        w1.astype(jnp.bfloat16))
    w2_p = jnp.zeros((HIDDEN_P, OUT_P), jnp.bfloat16).at[:HIDDEN, :NUM_CLASSES].set(
        w2.astype(jnp.bfloat16))
    b_p = jnp.zeros((2, OUT_P), jnp.float32)
    b_p = b_p.at[0, :HIDDEN].set(b1.reshape(-1).astype(jnp.float32))
    b_p = b_p.at[1, :NUM_CLASSES].set(b2.reshape(-1).astype(jnp.float32))
    return w1_p, b_p, w2_p


@functools.partial(jax.jit, static_argnames=("block_b", "full_output"))
def nn_forward(x, w1_p, b_p, w2_p, *, block_b=2048, full_output=False):
    B, D = x.shape
    assert D == INPUT_SIZE

    # ---- choose batch tile --------------------------------------------------
    bb = max(16, min(block_b, _round_up(B, 16)))   # multiple of 16 (bf16 out sublanes)
    bb = _round_up(bb, 16)
    # Megacore (v7x, 2 TCs): split a 1-step grid, but never below 1024 rows per
    # tile so the fixed per-step overhead stays small.  On v5e/v6e this only
    # costs one extra ~0.35us step.
    if _round_up(B, bb) // bb == 1 and bb >= 2048:
        bb = _round_up(bb // 2, 16)
    B_pad = _round_up(B, bb)
    grid = (B_pad // bb,)

    # Pad only the batch tail (f32, no dtype conversion pass).
    x_p = x if B_pad == B else jnp.pad(x, ((0, B_pad - B), (0, 0)))

    cost = pl.CostEstimate(
        flops=2 * B_pad * (INPUT_SIZE * HIDDEN_P + HIDDEN_P * OUT_P),
        transcendentals=0,
        bytes_accessed=(B_pad * INPUT_SIZE * 4          # x (f32 in)
                        + B_pad * OUT_P * 2             # out (bf16)
                        + INPUT_SIZE * HIDDEN_P * 2     # w1 (bf16)
                        + HIDDEN_P * OUT_P * 2          # w2 (bf16)
                        + 2 * OUT_P * 4),               # biases
    )

    # Double-buffered f32 x tile dominates VMEM; leave headroom, cap at 48 MiB
    # (v7x physical VMEM is 64 MiB; v5e/v6e have 128 MiB).
    vmem_bytes = min(48 * 1024 * 1024,
                     max(32 * 1024 * 1024, 3 * bb * INPUT_SIZE * 4))

    out_p = pl.pallas_call(
        mlp_kernel,
        out_shape=jax.ShapeDtypeStruct((B_pad, OUT_P), jnp.bfloat16),
        grid_spec=pltpu.PrefetchScalarGridSpec(
            num_scalar_prefetch=0,
            grid=grid,
            in_specs=[
                pl.BlockSpec((bb, INPUT_SIZE), lambda i: (i, 0)),        # x tile
                pl.BlockSpec((INPUT_SIZE, HIDDEN_P), lambda i: (0, 0)),  # w1 (resident)
                pl.BlockSpec((2, OUT_P), lambda i: (0, 0)),              # b1/b2
                pl.BlockSpec((HIDDEN_P, OUT_P), lambda i: (0, 0)),       # w2 (resident)
            ],
            out_specs=pl.BlockSpec((bb, OUT_P), lambda i: (i, 0)),
        ),
        compiler_params=pltpu.CompilerParams(
            dimension_semantics=("parallel",),
            vmem_limit_bytes=vmem_bytes,
        ),
        cost_estimate=cost,
    )(x_p, w1_p, b_p, w2_p)

    if full_output:
        # Padded (B_pad, 128) bf16 block for consumers (argmax/softmax/loss)
        # that only read lanes 0..9 / rows 0..B-1, avoiding an extra HBM pass.
        # NOTE: padded tail rows contain relu(b1)@w2+b2 garbage — consumers
        # must ignore rows >= B.
        return out_p
    # Module-equivalent semantics: real (B, 10) logits.
    return out_p[:B, :NUM_CLASSES].astype(jnp.float32)


def init_params(key):
    """Deterministic init mimicking nn.Linear's default uniform(+-1/sqrt(fan_in))."""
    k1, k2, k3, k4 = jax.random.split(key, 4)
    bound1 = 1.0 / jnp.sqrt(float(INPUT_SIZE))
    bound2 = 1.0 / jnp.sqrt(float(HIDDEN))
    # Stored transposed relative to PyTorch (in_features, out_features) so the
    # kernel does x @ w directly.
    w1 = jax.random.uniform(k1, (INPUT_SIZE, HIDDEN), jnp.float32, -bound1, bound1)
    b1 = jax.random.uniform(k2, (1, HIDDEN), jnp.float32, -bound1, bound1)
    w2 = jax.random.uniform(k3, (HIDDEN, NUM_CLASSES), jnp.float32, -bound2, bound2)
    b2 = jax.random.uniform(k4, (1, NUM_CLASSES), jnp.float32, -bound2, bound2)
    return w1, b1, w2, b2


def nn_forward_ref(x, w1, b1, w2, b2):
    h = jnp.maximum(x @ w1 + b1, 0.0)
    return h @ w2 + b2


if __name__ == "__main__":
    key = jax.random.PRNGKey(0)
    kx, kp = jax.random.split(key)
    w1, b1, w2, b2 = init_params(kp)
    w1_p, b_p, w2_p = prepare_params(w1, b1, w2, b2)   # one-time pad/cast

    # (B=8, default tile -> 1-step grid) and (B=40, block_b=32 -> 2-step grid
    # with a padded tail) to exercise both paths at small shapes.
    for B, blk in ((8, 2048), (40, 32)):
        x = jax.random.normal(jax.random.fold_in(kx, B), (B, INPUT_SIZE), jnp.float32)
        out = jax.block_until_ready(nn_forward(x, w1_p, b_p, w2_p, block_b=blk))
        ref = nn_forward_ref(x, w1, b1, w2, b2)
        assert out.shape == (B, NUM_CLASSES)
        # bf16 weights/activations + bf16 output store -> looser tolerance.
        assert jnp.allclose(out, ref, atol=5e-2, rtol=5e-2), (
            float(jnp.max(jnp.abs(out - ref))))

    # Also exercise the fused-consumer path (padded bf16 block, no slice pass).
    B = 8
    x = jax.random.normal(jax.random.fold_in(kx, B), (B, INPUT_SIZE), jnp.float32)
    out_full = jax.block_until_ready(
        nn_forward(x, w1_p, b_p, w2_p, block_b=2048, full_output=True))
    assert out_full.shape[1] == OUT_P and out_full.dtype == jnp.bfloat16

    print("KERNEL_OK")
</pallas_src>

<mosaic_0001>
module attributes {stable_mosaic.version = 11 : i64} {
  func.func @mlp_kernel(%arg0: i32, %arg1: memref<16x784xf32, #tpu.memory_space<vmem>>, %arg2: memref<784x128xbf16, #tpu.memory_space<vmem>>, %arg3: memref<2x128xf32, #tpu.memory_space<vmem>>, %arg4: memref<128x128xbf16, #tpu.memory_space<vmem>>, %arg5: memref<16x128xbf16, #tpu.memory_space<vmem>>) attributes {dimension_semantics = [#tpu.dimension_semantics<parallel>], iteration_bounds = array<i64: 1>, scalar_prefetch = 0 : i64, scratch_operands = 0 : i64, tpu.core_type = #tpu.core_type<tc>, window_params = [{transform_indices = @transform_0, window_bounds = array<i64: 16, 784>}, {pipeline_mode = #tpu.pipeline_mode<synchronous>, transform_indices = @transform_1, window_bounds = array<i64: 784, 128>}, {pipeline_mode = #tpu.pipeline_mode<synchronous>, transform_indices = @transform_2, window_bounds = array<i64: 2, 128>}, {pipeline_mode = #tpu.pipeline_mode<synchronous>, transform_indices = @transform_3, window_bounds = array<i64: 128, 128>}, {transform_indices = @transform_4, window_bounds = array<i64: 16, 128>}]} {
    %c0 = arith.constant 0 : index
    %c0_0 = arith.constant 0 : index
    %0 = vector.load %arg1[%c0, %c0_0] : memref<16x784xf32, #tpu.memory_space<vmem>>, vector<16x784xf32>
    %1 = arith.truncf %0 : vector<16x784xf32> to vector<16x784xbf16>
    %c0_1 = arith.constant 0 : index
    %c0_2 = arith.constant 0 : index
    %2 = vector.load %arg2[%c0_1, %c0_2] : memref<784x128xbf16, #tpu.memory_space<vmem>>, vector<784x128xbf16>
    %cst = arith.constant dense<0.000000e+00> : vector<16x128xf32>
    %3 = tpu.matmul %1, %2, %cst {dimension_numbers = #tpu.dot_dimension_numbers<[1], [0], [0], [1], [0, 0, 1, 1], [], []>} : vector<16x784xbf16>, vector<784x128xbf16>, vector<16x128xf32> -> vector<16x128xf32>
    %c0_3 = arith.constant 0 : index
    %c0_4 = arith.constant 0 : index
    %4 = vector.load %arg3[%c0_3, %c0_4] : memref<2x128xf32, #tpu.memory_space<vmem>>, vector<1x128xf32>
    %5 = vector.broadcast %4 : vector<1x128xf32> to vector<16x128xf32>
    %6 = arith.addf %3, %5 : vector<16x128xf32>
    %cst_5 = arith.constant 0.000000e+00 : f32
    %7 = vector.broadcast %cst_5 : f32 to vector<16x128xf32>
    %8 = arith.maximumf %6, %7 : vector<16x128xf32>
    %9 = arith.truncf %8 : vector<16x128xf32> to vector<16x128xbf16>
    %c0_6 = arith.constant 0 : index
    %c0_7 = arith.constant 0 : index
    %10 = vector.load %arg4[%c0_6, %c0_7] : memref<128x128xbf16, #tpu.memory_space<vmem>>, vector<128x128xbf16>
    %cst_8 = arith.constant dense<0.000000e+00> : vector<16x128xf32>
    %11 = tpu.matmul %9, %10, %cst_8 {dimension_numbers = #tpu.dot_dimension_numbers<[1], [0], [0], [1], [0, 0, 1, 1], [], []>} : vector<16x128xbf16>, vector<128x128xbf16>, vector<16x128xf32> -> vector<16x128xf32>
    %c1 = arith.constant 1 : index
    %c0_9 = arith.constant 0 : index
    %12 = vector.load %arg3[%c1, %c0_9] : memref<2x128xf32, #tpu.memory_space<vmem>>, vector<1x128xf32>
    %13 = vector.broadcast %12 : vector<1x128xf32> to vector<16x128xf32>
    %14 = arith.addf %11, %13 : vector<16x128xf32>
    %15 = arith.truncf %14 : vector<16x128xf32> to vector<16x128xbf16>
    %c0_10 = arith.constant 0 : index
    %c0_11 = arith.constant 0 : index
    %16 = vector.load %arg5[%c0_10, %c0_11] : memref<16x128xbf16, #tpu.memory_space<vmem>>, vector<16x128xbf16>
    tpu.vector_store %arg5[%c0_10, %c0_11], %15 {strides = array<i32>} : memref<16x128xbf16, #tpu.memory_space<vmem>>, vector<16x128xbf16>,
    return
  }
  func.func @transform_0(%arg0: i32) -> (i32, i32) {
    %c0_i32 = arith.constant 0 : i32
    %c0_i32_0 = arith.constant 0 : i32
    return %arg0, %c0_i32 : i32, i32
  }
  func.func @transform_1(%arg0: i32) -> (i32, i32) {
    %c0_i32 = arith.constant 0 : i32
    %c0_i32_0 = arith.constant 0 : i32
    %c0_i32_1 = arith.constant 0 : i32
    return %c0_i32, %c0_i32_0 : i32, i32
  }
  func.func @transform_2(%arg0: i32) -> (i32, i32) {
    %c0_i32 = arith.constant 0 : i32
    %c0_i32_0 = arith.constant 0 : i32
    %c0_i32_1 = arith.constant 0 : i32
    return %c0_i32, %c0_i32_0 : i32, i32
  }
  func.func @transform_3(%arg0: i32) -> (i32, i32) {
    %c0_i32 = arith.constant 0 : i32
    %c0_i32_0 = arith.constant 0 : i32
    %c0_i32_1 = arith.constant 0 : i32
    return %c0_i32, %c0_i32_0 : i32, i32
  }
  func.func @transform_4(%arg0: i32) -> (i32, i32) {
    %c0_i32 = arith.constant 0 : i32
    %c0_i32_0 = arith.constant 0 : i32
    return %arg0, %c0_i32 : i32, i32
  }
}

</mosaic_0001>

<llo_original>
// kernel: nn_forward.1
$region0: #{nn_forward.1}
  #allocation0 [shape = 'u32[]', space=smem, size = 0x4, offset = 0x4, fixed_abs, tag = 'smem constant byte address 0x4 - core index']
  #allocation1 [shape = 'u32[72,128]{1,0:T(1,128)}', space=vmem, size = 0x9000, scoped, tag = 'internal scratch']
  %s0 = inlined_call_operand.vmem [shape: f32[16,784], index: 0, kind: input, shape index: {}]
  %s1 = inlined_call_operand.hbm [shape: bf16[784,128], index: 1, kind: input, shape index: {}]
  %s2 = inlined_call_operand.vmem [shape: f32[2,128], index: 2, kind: input, shape index: {}]
  %s3 = inlined_call_operand.vmem [shape: bf16[128,128], index: 3, kind: input, shape index: {}]
  %s4 = inlined_call_operand.vmem [shape: bf16[16,128], index: 4, kind: output, shape index: {}]
  %s5 = sld [smem:[#allocation0]]
  $region30: #{nn_forward.1} parent=0
    _
  %s7 = ssub.s32 1, %s5
  %s8 = scalar_select 0, %s7, %s5
  $region1: #{nn_forward.1} parent=0
    #allocation2 [shape = 'u8[200704]{0}', space=vmem, size = 0x31000, scoped, tag = 'input window, operand 1, single buffered']
    #allocation3 [shape = 's32[1]{0}', space=sflag, size = 0x4, scoped, tag = 'scoped memory for nn_forward.1']
    %9 = vsyncpa [#allocation3], 0
    // Predicated region
    $region2: #{nn_forward.1} parent=1 // pred_check
      _
    $region3: #{nn_forward.1} parent=1 // pred_check_branch
      %11 = sbr.rel (0) target = $region5
    $region4: #{nn_forward.1} parent=1 // pred_region
      _
    $region5: #{nn_forward.1} parent=1 // pred_fallthru
      _
    // Predicated region
    $region6: #{nn_forward.1} parent=1 // pred_check
      _
    $region7: #{nn_forward.1} parent=1 // pred_check_branch
      %13 = sbr.rel (0) target = $region9
    $region8: #{nn_forward.1} parent=1 // pred_region
      %15 = vsyncadd [#allocation3], 0
      %s16 = sshll.u32 %s1, 4
      %s17 = int_to_ptr.hbm [resolvable:$true] %s16
      %s18 = sshll.u32 [#allocation2], 4
      %s19 = int_to_ptr.vmem [resolvable:$true] %s18
      %24 = dma.hbm_to_vmem [thread:$0]  %s17, 6272, %s19, [#allocation3], 64, 64, 4
    $region9: #{nn_forward.1} parent=1 // pred_fallthru
      _
    // Predicated region
    $region10: #{nn_forward.1} parent=1 // pred_check
      _
    $region11: #{nn_forward.1} parent=1 // pred_check_branch
      %26 = sbr.rel (0) target = $region13
    $region12: #{nn_forward.1} parent=1 // pred_region
      _
    $region13: #{nn_forward.1} parent=1 // pred_fallthru
      _
    // Predicated region
    $region14: #{nn_forward.1} parent=1 // pred_check
      _
    $region15: #{nn_forward.1} parent=1 // pred_check_branch
      %28 = sbr.rel (0) target = $region17
    $region16: #{nn_forward.1} parent=1 // pred_region
      _
    $region17: #{nn_forward.1} parent=1 // pred_fallthru
      _
    // Predicated region
    $region18: #{nn_forward.1} parent=1 // pred_check
      _
    $region19: #{nn_forward.1} parent=1 // pred_check_branch
      %30 = sbr.rel (0) target = $region21
    $region20: #{nn_forward.1} parent=1 // pred_region
      %32 = dma.done [#allocation3], 6272
    $region21: #{nn_forward.1} parent=1 // pred_fallthru
      _
    %v34 = vld [vmem:[%s0] sm:$0xff]
    %v35 = vld [vmem:[%s0 + $0x8] sm:$0xff]
    %v36 = vld [vmem:[%s0 + $0x10] sm:$0xff]
    %v37 = vld [vmem:[%s0 + $0x18] sm:$0xff]
    %v38 = vld [vmem:[%s0 + $0x20] sm:$0xff]
    %v39 = vld [vmem:[%s0 + $0x28] sm:$0xff]
    %v40 = vld [vmem:[%s0 + $0x30] sm:$0xff]
    %v41 = vld [vmem:[%s0 + $0x38] sm:$0xff]
    %v42 = vld [vmem:[%s0 + $0x40] sm:$0xff]
    %v43 = vld [vmem:[%s0 + $0x48] sm:$0xff]
    %v44 = vld [vmem:[%s0 + $0x50] sm:$0xff]
    %v45 = vld [vmem:[%s0 + $0x58] sm:$0xff]
    %v46 = vld [vmem:[%s0 + $0x60] sm:$0xff]
    %v47 = vld [vmem:[%s0 + $0x68] sm:$0xff]
    %v48 = vpack.c.bf16 %v41, %v34
    %v49 = vpack.c.bf16 %v42, %v35
    %v50 = vpack.c.bf16 %v43, %v36
    %v51 = vpack.c.bf16 %v44, %v37
    %v52 = vpack.c.bf16 %v45, %v38
    %v53 = vpack.c.bf16 %v46, %v39
    %v54 = vpack.c.bf16 %v47, %v40
    %v55 = vld [vmem:[#allocation2] sm:$0xf]
    %v56 = vld [vmem:[#allocation2 + $0x4] sm:$0xf]
    %v57 = vld [vmem:[#allocation2 + $0x8] sm:$0xf]
    %v58 = vld [vmem:[#allocation2 + $0xc] sm:$0xf]
    %v59 = vld [vmem:[#allocation2 + $0x10] sm:$0xf]
    %v60 = vld [vmem:[#allocation2 + $0x14] sm:$0xf]
    %v61 = vld [vmem:[#allocation2 + $0x18] sm:$0xf]
    %v62 = vld [vmem:[#allocation2 + $0x1c] sm:$0xf]
    %v63 = vld [vmem:[#allocation2 + $0x20] sm:$0xf]
    %v64 = vld [vmem:[#allocation2 + $0x24] sm:$0xf]
    %v65 = vld [vmem:[#allocation2 + $0x28] sm:$0xf]
    %v66 = vld [vmem:[#allocation2 + $0x2c] sm:$0xf]
    %v67 = vld [vmem:[#allocation2 + $0x30] sm:$0xf]
    %v68 = vld [vmem:[#allocation2 + $0x34] sm:$0xf]
    %v69 = vld [vmem:[#allocation2 + $0x38] sm:$0xf]
    %v70 = vld [vmem:[#allocation2 + $0x3c] sm:$0xf]
    %v71 = vld [vmem:[#allocation2 + $0x40] sm:$0xf]
    %v72 = vld [vmem:[#allocation2 + $0x44] sm:$0xf]
    %v73 = vld [vmem:[#allocation2 + $0x48] sm:$0xf]
    %v74 = vld [vmem:[#allocation2 + $0x4c] sm:$0xf]
    %v75 = vld [vmem:[#allocation2 + $0x50] sm:$0xf]
    %v76 = vld [vmem:[#allocation2 + $0x54] sm:$0xf]
    %v77 = vld [vmem:[#allocation2 + $0x58] sm:$0xf]
    %v78 = vld [vmem:[#allocation2 + $0x5c] sm:$0xf]
    %v79 = vld [vmem:[#allocation2 + $0x60] sm:$0xf]
    %v80 = vld [vmem:[#allocation2 + $0x64] sm:$0xf]
    %v81 = vld [vmem:[#allocation2 + $0x68] sm:$0xf]
    %v82 = vld [vmem:[#allocation2 + $0x6c] sm:$0xf]
    %v83 = vld [vmem:[#allocation2 + $0x70] sm:$0xf]
    %v84 = vld [vmem:[#allocation2 + $0x74] sm:$0xf]
    %v85 = vld [vmem:[#allocation2 + $0x78] sm:$0xf]
    %v86 = vld [vmem:[#allocation2 + $0x7c] sm:$0xf]
    %v87 = vld [vmem:[#allocation2 + $0x80] sm:$0xf]
    %v88 = vld [vmem:[#allocation2 + $0x84] sm:$0xf]
    %v89 = vld [vmem:[#allocation2 + $0x88] sm:$0xf]
    %v90 = vld [vmem:[#allocation2 + $0x8c] sm:$0xf]
    %v91 = vld [vmem:[#allocation2 + $0x90] sm:$0xf]
    %v92 = vld [vmem:[#allocation2 + $0x94] sm:$0xf]
    %v93 = vld [vmem:[#allocation2 + $0x98] sm:$0xf]
    %v94 = vld [vmem:[#allocation2 + $0x9c] sm:$0xf]
    %v95 = vld [vmem:[#allocation2 + $0xa0] sm:$0xf]
    %v96 = vld [vmem:[#allocation2 + $0xa4] sm:$0xf]
    %v97 = vld [vmem:[#allocation2 + $0xa8] sm:$0xf]
    %v98 = vld [vmem:[#allocation2 + $0xac] sm:$0xf]
    %v99 = vld [vmem:[#allocation2 + $0xb0] sm:$0xf]
    %v100 = vld [vmem:[#allocation2 + $0xb4] sm:$0xf]
    %v101 = vld [vmem:[#allocation2 + $0xb8] sm:$0xf]
    %v102 = vld [vmem:[#allocation2 + $0xbc] sm:$0xf]
    %v103 = vld [vmem:[#allocation2 + $0xc0] sm:$0xf]
    %v104 = vld [vmem:[#allocation2 + $0xc4] sm:$0xf]
    %v105 = vld [vmem:[#allocation2 + $0xc8] sm:$0xf]
    %v106 = vld [vmem:[#allocation2 + $0xcc] sm:$0xf]
    %v107 = vld [vmem:[#allocation2 + $0xd0] sm:$0xf]
    %v108 = vld [vmem:[#allocation2 + $0xd4] sm:$0xf]
    %v109 = vld [vmem:[#allocation2 + $0xd8] sm:$0xf]
    %v110 = vld [vmem:[#allocation2 + $0xdc] sm:$0xf]
    %v111 = vld [vmem:[#allocation2 + $0xe0] sm:$0xf]
    %v112 = vld [vmem:[#allocation2 + $0xe4] sm:$0xf]
    %v113 = vld [vmem:[#allocation2 + $0xe8] sm:$0xf]
    %v114 = vld [vmem:[#allocation2 + $0xec] sm:$0xf]
    %v115 = vld [vmem:[#allocation2 + $0xf0] sm:$0xf]
    %v116 = vld [vmem:[#allocation2 + $0xf4] sm:$0xf]
    %v117 = vld [vmem:[#allocation2 + $0xf8] sm:$0xf]
    %v118 = vld [vmem:[#allocation2 + $0xfc] sm:$0xf]
    %v119 = vld [vmem:[#allocation2 + $0x100] sm:$0xf]
    %v120 = vld [vmem:[#allocation2 + $0x104] sm:$0xf]
    %v121 = vld [vmem:[#allocation2 + $0x108] sm:$0xf]
    %v122 = vld [vmem:[#allocation2 + $0x10c] sm:$0xf]
    %v123 = vld [vmem:[#allocation2 + $0x110] sm:$0xf]
    %v124 = vld [vmem:[#allocation2 + $0x114] sm:$0xf]
    %v125 = vld [vmem:[#allocation2 + $0x118] sm:$0xf]
    %v126 = vld [vmem:[#allocation2 + $0x11c] sm:$0xf]
    %v127 = vld [vmem:[#allocation2 + $0x120] sm:$0xf]
    %v128 = vld [vmem:[#allocation2 + $0x124] sm:$0xf]
    %v129 = vld [vmem:[#allocation2 + $0x128] sm:$0xf]
    %v130 = vld [vmem:[#allocation2 + $0x12c] sm:$0xf]
    %v131 = vld [vmem:[#allocation2 + $0x130] sm:$0xf]
    %v132 = vld [vmem:[#allocation2 + $0x134] sm:$0xf]
    %v133 = vld [vmem:[#allocation2 + $0x138] sm:$0xf]
    %v134 = vld [vmem:[#allocation2 + $0x13c] sm:$0xf]
    %v135 = vld [vmem:[#allocation2 + $0x140] sm:$0xf]
    %v136 = vld [vmem:[#allocation2 + $0x144] sm:$0xf]
    %v137 = vld [vmem:[#allocation2 + $0x148] sm:$0xf]
    %v138 = vld [vmem:[#allocation2 + $0x14c] sm:$0xf]
    %v139 = vld [vmem:[#allocation2 + $0x150] sm:$0xf]
    %v140 = vld [vmem:[#allocation2 + $0x154] sm:$0xf]
    %v141 = vld [vmem:[#allocation2 + $0x158] sm:$0xf]
    %v142 = vld [vmem:[#allocation2 + $0x15c] sm:$0xf]
    %v143 = vld [vmem:[#allocation2 + $0x160] sm:$0xf]
    %v144 = vld [vmem:[#allocation2 + $0x164] sm:$0xf]
    %v145 = vld [vmem:[#allocation2 + $0x168] sm:$0xf]
    %v146 = vld [vmem:[#allocation2 + $0x16c] sm:$0xf]
    %v147 = vld [vmem:[#allocation2 + $0x170] sm:$0xf]
    %v148 = vld [vmem:[#allocation2 + $0x174] sm:$0xf]
    %v149 = vld [vmem:[#allocation2 + $0x178] sm:$0xf]
    %v150 = vld [vmem:[#allocation2 + $0x17c] sm:$0xf]
    %v151 = vld [vmem:[#allocation2 + $0x180] sm:$0xf]
    %v152 = vld [vmem:[#allocation2 + $0x184] sm:$0xf]
    %v153 = vld [vmem:[%s2] sm:$0x1]
    %v154 = vperm.slane %v153, 0
    %v253 = vunpack.c.l.b16 %v55
    %v254 = vunpack.c.l.b16 %v56
    %v255 = vunpack.c.l.b16 %v57
    %v256 = vunpack.c.l.b16 %v58
    %v257 = vunpack.c.l.b16 %v59
    %v258 = vunpack.c.l.b16 %v60
    %v259 = vunpack.c.l.b16 %v61
    %v260 = vunpack.c.l.b16 %v62
    %v261 = vunpack.c.l.b16 %v63
    %v262 = vunpack.c.l.b16 %v64
    %v263 = vunpack.c.l.b16 %v65
    %v264 = vunpack.c.l.b16 %v66
    %v265 = vunpack.c.l.b16 %v67
    %v266 = vunpack.c.l.b16 %v68
    %v267 = vunpack.c.l.b16 %v69
    %v268 = vunpack.c.l.b16 %v70
    %v269 = vunpack.c.l.b16 %v71
    %v270 = vunpack.c.l.b16 %v72
    %v271 = vunpack.c.l.b16 %v73
    %v272 = vunpack.c.l.b16 %v74
    %v273 = vunpack.c.l.b16 %v75
    %v274 = vunpack.c.l.b16 %v76
    %v275 = vunpack.c.l.b16 %v77
    %v276 = vunpack.c.l.b16 %v78
    %v277 = vunpack.c.l.b16 %v79
    %v278 = vunpack.c.l.b16 %v80
    %v279 = vunpack.c.l.b16 %v81
    %v280 = vunpack.c.l.b16 %v82
    %v281 = vunpack.c.l.b16 %v83
    %v282 = vunpack.c.l.b16 %v84
    %v283 = vunpack.c.l.b16 %v85
    %v284 = vunpack.c.l.b16 %v86
    %v285 = vunpack.c.l.b16 %v87
    %v286 = vunpack.c.l.b16 %v88
    %v287 = vunpack.c.l.b16 %v89
    %v288 = vunpack.c.l.b16 %v90
    %v289 = vunpack.c.l.b16 %v91
    %v290 = vunpack.c.l.b16 %v92
    %v291 = vunpack.c.l.b16 %v93
    %v292 = vunpack.c.l.b16 %v94
    %v293 = vunpack.c.l.b16 %v95
    %v294 = vunpack.c.l.b16 %v96
    %v295 = vunpack.c.l.b16 %v97
    %v296 = vunpack.c.l.b16 %v98
    %v297 = vunpack.c.l.b16 %v99
    %v298 = vunpack.c.l.b16 %v100
    %v299 = vunpack.c.l.b16 %v101
    %v300 = vunpack.c.l.b16 %v102
    %v301 = vunpack.c.l.b16 %v103
    %v302 = vunpack.c.l.b16 %v104
    %v303 = vunpack.c.l.b16 %v105
    %v304 = vunpack.c.l.b16 %v106
    %v305 = vunpack.c.l.b16 %v107
    %v306 = vunpack.c.l.b16 %v108
    %v307 = vunpack.c.l.b16 %v109
    %v308 = vunpack.c.l.b16 %v110
    %v309 = vunpack.c.l.b16 %v111
    %v310 = vunpack.c.l.b16 %v112
    %v311 = vunpack.c.l.b16 %v113
    %v312 = vunpack.c.l.b16 %v114
    %v313 = vunpack.c.l.b16 %v115
    %v314 = vunpack.c.l.b16 %v116
    %v315 = vunpack.c.l.b16 %v117
    %v316 = vunpack.c.l.b16 %v118
    %v317 = vunpack.c.l.b16 %v119
    %v318 = vunpack.c.l.b16 %v120
    %v319 = vunpack.c.l.b16 %v121
    %v320 = vunpack.c.l.b16 %v122
    %v321 = vunpack.c.l.b16 %v123
    %v322 = vunpack.c.l.b16 %v124
    %v323 = vunpack.c.l.b16 %v125
    %v324 = vunpack.c.l.b16 %v126
    %v325 = vunpack.c.l.b16 %v127
    %v326 = vunpack.c.l.b16 %v128
    %v327 = vunpack.c.l.b16 %v129
    %v328 = vunpack.c.l.b16 %v130
    %v329 = vunpack.c.l.b16 %v131
    %v330 = vunpack.c.l.b16 %v132
    %v331 = vunpack.c.l.b16 %v133
    %v332 = vunpack.c.l.b16 %v134
    %v333 = vunpack.c.l.b16 %v135
    %v334 = vunpack.c.l.b16 %v136
    %v335 = vunpack.c.l.b16 %v137
    %v336 = vunpack.c.l.b16 %v138
    %v337 = vunpack.c.l.b16 %v139
    %v338 = vunpack.c.l.b16 %v140
    %v339 = vunpack.c.l.b16 %v141
    %v340 = vunpack.c.l.b16 %v142
    %v341 = vunpack.c.l.b16 %v143
    %v342 = vunpack.c.l.b16 %v144
    %v343 = vunpack.c.l.b16 %v145
    %v344 = vunpack.c.l.b16 %v146
    %v345 = vunpack.c.l.b16 %v147
    %v346 = vunpack.c.l.b16 %v148
    %v347 = vunpack.c.l.b16 %v149
    %v348 = vunpack.c.l.b16 %v150
    %v349 = vunpack.c.l.b16 %v151
    %v350 = vunpack.c.l.b16 %v152
    %v351 = vpack.c.b16 %v254, %v253
    %v352 = vpack.c.b16 %v256, %v255
    %v353 = vpack.c.b16 %v258, %v257
    %v354 = vpack.c.b16 %v260, %v259
    %v355 = vpack.c.b16 %v262, %v261
    %v356 = vpack.c.b16 %v264, %v263
    %v357 = vpack.c.b16 %v266, %v265
    %v358 = vpack.c.b16 %v268, %v267
    %v359 = vpack.c.b16 %v270, %v269
    %v360 = vpack.c.b16 %v272, %v271
    %v361 = vpack.c.b16 %v274, %v273
    %v362 = vpack.c.b16 %v276, %v275
    %v363 = vpack.c.b16 %v278, %v277
    %v364 = vpack.c.b16 %v280, %v279
    %v365 = vpack.c.b16 %v282, %v281
    %v366 = vpack.c.b16 %v284, %v283
    %v367 = vpack.c.b16 %v286, %v285
    %v368 = vpack.c.b16 %v288, %v287
    %v369 = vpack.c.b16 %v290, %v289
    %v370 = vpack.c.b16 %v292, %v291
    %v371 = vpack.c.b16 %v294, %v293
    %v372 = vpack.c.b16 %v296, %v295
    %v373 = vpack.c.b16 %v298, %v297
    %v374 = vpack.c.b16 %v300, %v299
    %v375 = vpack.c.b16 %v302, %v301
    %v376 = vpack.c.b16 %v304, %v303
    %v377 = vpack.c.b16 %v306, %v305
    %v378 = vpack.c.b16 %v308, %v307
    %v379 = vpack.c.b16 %v310, %v309
    %v380 = vpack.c.b16 %v312, %v311
    %v381 = vpack.c.b16 %v314, %v313
    %v382 = vpack.c.b16 %v316, %v315
    %v383 = vpack.c.b16 %v318, %v317
    %v384 = vpack.c.b16 %v320, %v319
    %v385 = vpack.c.b16 %v322, %v321
    %v386 = vpack.c.b16 %v324, %v323
    %v387 = vpack.c.b16 %v326, %v325
    %v388 = vpack.c.b16 %v328, %v327
    %v389 = vpack.c.b16 %v330, %v329
    %v390 = vpack.c.b16 %v332, %v331
    %v391 = vpack.c.b16 %v334, %v333
    %v392 = vpack.c.b16 %v336, %v335
    %v393 = vpack.c.b16 %v338, %v337
    %v394 = vpack.c.b16 %v340, %v339
    %v395 = vpack.c.b16 %v342, %v341
    %v396 = vpack.c.b16 %v344, %v343
    %v397 = vpack.c.b16 %v346, %v345
    %v398 = vpack.c.b16 %v348, %v347
    %v399 = vpack.c.b16 %v350, %v349
    %vm449 = vcmask 130048
    %v451 = vsel %vm449, %v54, 0
    %453 = vmatpush.bf16.msra.mxu0 %v358
    %454 = vmatpush.bf16.msra.mxu0 %v357
    %455 = vmatpush.bf16.msra.mxu0 %v356
    %456 = vmatpush.bf16.msra.mxu0 %v355
    %457 = vmatpush.bf16.msra.mxu0 %v354
    %458 = vmatpush.bf16.msra.mxu0 %v353
    %459 = vmatpush.bf16.msra.mxu0 %v352
    %460 = vmatpush.bf16.msra.mxu0 %v351
    %461 = vmatmul.bf16.gmra.mxu0 %v48
    %v462 = vpop.f32.mrf.mxu0
    %v463 = vadd.f32 %v154, %v462
    %v464 = vpop.f32.mrf.mxu0
    %v465 = vadd.f32 %v154, %v464
    %466 = vdwg.mxu0
    %467 = vmatpush.bf16.msra.mxu0 %v366
    %468 = vmatpush.bf16.msra.mxu0 %v365
    %469 = vmatpush.bf16.msra.mxu0 %v364
    %470 = vmatpush.bf16.msra.mxu0 %v363
    %471 = vmatpush.bf16.msra.mxu0 %v362
    %472 = vmatpush.bf16.msra.mxu0 %v361
    %473 = vmatpush.bf16.msra.mxu0 %v360
    %474 = vmatpush.bf16.msra.mxu0 %v359
    %475 = vmatmul.bf16.gmra.mxu0 %v49
    %v476 = vpop.f32.mrf.mxu0
    %v477 = vadd.f32 %v463, %v476
    %v478 = vpop.f32.mrf.mxu0
    %v479 = vadd.f32 %v465, %v478
    %480 = vdwg.mxu0
    %481 = vmatpush.bf16.msra.mxu0 %v374
    %482 = vmatpush.bf16.msra.mxu0 %v373
    %483 = vmatpush.bf16.msra.mxu0 %v372
    %484 = vmatpush.bf16.msra.mxu0 %v371
    %485 = vmatpush.bf16.msra.mxu0 %v370
    %486 = vmatpush.bf16.msra.mxu0 %v369
    %487 = vmatpush.bf16.msra.mxu0 %v368
    %488 = vmatpush.bf16.msra.mxu0 %v367
    %489 = vmatmul.bf16.gmra.mxu0 %v50
    %v490 = vpop.f32.mrf.mxu0
    %v491 = vadd.f32 %v477, %v490
    %v492 = vpop.f32.mrf.mxu0
    %v493 = vadd.f32 %v479, %v492
    %494 = vdwg.mxu0
    %495 = vmatpush.bf16.msra.mxu0 %v382
    %496 = vmatpush.bf16.msra.mxu0 %v381
    %497 = vmatpush.bf16.msra.mxu0 %v380
    %498 = vmatpush.bf16.msra.mxu0 %v379
    %499 = vmatpush.bf16.msra.mxu0 %v378
    %500 = vmatpush.bf16.msra.mxu0 %v377
    %501 = vmatpush.bf16.msra.mxu0 %v376
    %502 = vmatpush.bf16.msra.mxu0 %v375
    %503 = vmatmul.bf16.gmra.mxu0 %v51
    %v504 = vpop.f32.mrf.mxu0
    %v505 = vadd.f32 %v491, %v504
    %v506 = vpop.f32.mrf.mxu0
    %v507 = vadd.f32 %v493, %v506
    %508 = vdwg.mxu0
    %509 = vmatpush.bf16.msra.mxu0 %v390
    %510 = vmatpush.bf16.msra.mxu0 %v389
    %511 = vmatpush.bf16.msra.mxu0 %v388
    %512 = vmatpush.bf16.msra.mxu0 %v387
    %513 = vmatpush.bf16.msra.mxu0 %v386
    %514 = vmatpush.bf16.msra.mxu0 %v385
    %515 = vmatpush.bf16.msra.mxu0 %v384
    %516 = vmatpush.bf16.msra.mxu0 %v383
    %517 = vmatmul.bf16.gmra.mxu0 %v52
    %v518 = vpop.f32.mrf.mxu0
    %v519 = vadd.f32 %v505, %v518
    %v520 = vpop.f32.mrf.mxu0
    %v521 = vadd.f32 %v507, %v520
    %522 = vdwg.mxu0
    %523 = vmatpush.bf16.msra.mxu0 %v398
    %524 = vmatpush.bf16.msra.mxu0 %v397
    %525 = vmatpush.bf16.msra.mxu0 %v396
    %526 = vmatpush.bf16.msra.mxu0 %v395
    %527 = vmatpush.bf16.msra.mxu0 %v394
    %528 = vmatpush.bf16.msra.mxu0 %v393
    %529 = vmatpush.bf16.msra.mxu0 %v392
    %530 = vmatpush.bf16.msra.mxu0 %v391
    %531 = vmatmul.bf16.gmra.mxu0 %v53
    %v532 = vpop.f32.mrf.mxu0
    %v533 = vadd.f32 %v519, %v532
    %v534 = vpop.f32.mrf.mxu0
    %v535 = vadd.f32 %v521, %v534
    %536 = vdwg.mxu0
    %537 = vmatpush.bf16.msra.mxu0 0
    %538 = vmatpush.bf16.msra.mxu0 0
    %539 = vmatpush.bf16.msra.mxu0 0
    %540 = vmatpush.bf16.msra.mxu0 0
    %541 = vmatpush.bf16.msra.mxu0 0
    %542 = vmatpush.bf16.msra.mxu0 0
    %543 = vmatpush.bf16.msra.mxu0 0
    %544 = vmatpush.bf16.msra.mxu0 %v399
    %545 = vmatmul.bf16.gmra.mxu0 %v451
    %v546 = vpop.f32.mrf.mxu0
    %v547 = vadd.f32 %v533, %v546
    %v548 = vpop.f32.mrf.mxu0
    %v549 = vadd.f32 %v535, %v548
    %550 = vdwg.mxu0
    %v551 = vmax.f32 %v547, 0.0
    %v552 = vmax.f32 %v549, 0.0
    %v553 = vpack.c.bf16 %v552, %v551
    %v554 = vld [vmem:[%s3] sm:$0xf]
    %v555 = vld [vmem:[%s3 + $0x4] sm:$0xf]
    %v556 = vld [vmem:[%s3 + $0x8] sm:$0xf]
    %v557 = vld [vmem:[%s3 + $0xc] sm:$0xf]
    %v558 = vld [vmem:[%s3 + $0x10] sm:$0xf]
    %v559 = vld [vmem:[%s3 + $0x14] sm:$0xf]
    %v560 = vld [vmem:[%s3 + $0x18] sm:$0xf]
    %v561 = vld [vmem:[%s3 + $0x1c] sm:$0xf]
    %v562 = vld [vmem:[%s3 + $0x20] sm:$0xf]
    %v563 = vld [vmem:[%s3 + $0x24] sm:$0xf]
    %v564 = vld [vmem:[%s3 + $0x28] sm:$0xf]
    %v565 = vld [vmem:[%s3 + $0x2c] sm:$0xf]
    %v566 = vld [vmem:[%s3 + $0x30] sm:$0xf]
    %v567 = vld [vmem:[%s3 + $0x34] sm:$0xf]
    %v568 = vld [vmem:[%s3 + $0x38] sm:$0xf]
    %v569 = vld [vmem:[%s3 + $0x3c] sm:$0xf]
    %v570 = vld [vmem:[%s2 + $0x1] sm:$0x1]
    %v571 = vperm.slane %v570, 0
    %v588 = vunpack.c.l.b16 %v554
    %v589 = vunpack.c.l.b16 %v555
    %v590 = vunpack.c.l.b16 %v556
    %v591 = vunpack.c.l.b16 %v557
    %v592 = vunpack.c.l.b16 %v558
    %v593 = vunpack.c.l.b16 %v559
    %v594 = vunpack.c.l.b16 %v560
    %v595 = vunpack.c.l.b16 %v561
    %v596 = vunpack.c.l.b16 %v562
    %v597 = vunpack.c.l.b16 %v563
    %v598 = vunpack.c.l.b16 %v564
    %v599 = vunpack.c.l.b16 %v565
    %v600 = vunpack.c.l.b16 %v566
    %v601 = vunpack.c.l.b16 %v567
    %v602 = vunpack.c.l.b16 %v568
    %v603 = vunpack.c.l.b16 %v569
    %v604 = vpack.c.b16 %v589, %v588
    %v605 = vpack.c.b16 %v591, %v590
    %v606 = vpack.c.b16 %v593, %v592
    %v607 = vpack.c.b16 %v595, %v594
    %v608 = vpack.c.b16 %v597, %v596
    %v609 = vpack.c.b16 %v599, %v598
    %v610 = vpack.c.b16 %v601, %v600
    %v611 = vpack.c.b16 %v603, %v602
    %620 = vmatpush.bf16.msra.mxu0 %v611
    %621 = vmatpush.bf16.msra.mxu0 %v610
    %622 = vmatpush.bf16.msra.mxu0 %v609
    %623 = vmatpush.bf16.msra.mxu0 %v608
    %624 = vmatpush.bf16.msra.mxu0 %v607
    %625 = vmatpush.bf16.msra.mxu0 %v606
    %626 = vmatpush.bf16.msra.mxu0 %v605
    %627 = vmatpush.bf16.msra.mxu0 %v604
    %628 = vmatmul.bf16.gmra.mxu0 %v553
    %v629 = vpop.f32.mrf.mxu0
    %v630 = vadd.f32 %v571, %v629
    %v631 = vpop.f32.mrf.mxu0
    %v632 = vadd.f32 %v571, %v631
    %633 = vdwg.mxu0
    %v634 = vpack.c.bf16 %v630, %v630
    %v635 = vpack.c.bf16 %v632, %v632
    %636 = vst [vmem:[%s4] sm:$0xf] %v634
    %637 = vst [vmem:[%s4 + $0x4] sm:$0xf] %v635
    // Predicated region
    $region22: #{nn_forward.1} parent=1 // pred_check
      _
    $region23: #{nn_forward.1} parent=1 // pred_check_branch
      %639 = sbr.rel (0) target = $region25
    $region24: #{nn_forward.1} parent=1 // pred_region
      _
    $region25: #{nn_forward.1} parent=1 // pred_fallthru
      _
    // Predicated region
    $region26: #{nn_forward.1} parent=1 // pred_check
      _
    $region27: #{nn_forward.1} parent=1 // pred_check_branch
      %641 = sbr.rel (0) target = $region29
    $region28: #{nn_forward.1} parent=1 // pred_region
      _
    $region29: #{nn_forward.1} parent=1 // pred_fallthru
      _
    %642 = vsyncpa [#allocation3], 1

</llo_original>
